<compile_context>
chip_gen: v5e
topology: v5e:2x2
jax: 0.10.0
libtpu: 0.0.40
codegen_flags: <defaults>
</compile_context>

<pallas_src>
from functools import partial

import numpy as np
import jax
import jax.numpy as jnp
from jax.experimental import pallas as pl
from jax.experimental.pallas import tpu as pltpu


# ---------------------------------------------------------------------------
# Kernel: Bt batch elements per grid step
# ---------------------------------------------------------------------------
def attention_kernel(x_ref, wqkv_ref, bqkv_ref, wproj_ref, bproj_ref,
                     o_ref, attn_ref, *, num_heads, head_dim):
    Bt, N, D = x_ref.shape
    rows = Bt * N

    # Row-slab view of the block; bf16 into the MXU, f32 accumulation.
    x = x_ref[...].reshape(rows, D).astype(jnp.bfloat16)

    # ---- QKV projection (scale already folded into the Q columns) ----
    qkv = jnp.dot(x, wqkv_ref[...], preferred_element_type=jnp.float32)
    qkv = (qkv + bqkv_ref[...]).astype(jnp.bfloat16).reshape(Bt, N, 3 * D)

    # ---- Multi-head attention core, batched over Bt per head ----
    # attn_drop is Identity (p = 0.0).
    for h in range(num_heads):                                  # static unroll
        lo = h * head_dim
        q = qkv[:, :, lo:lo + head_dim]                         # (Bt, N, hd)
        k = qkv[:, :, D + lo:D + lo + head_dim]
        v = qkv[:, :, 2 * D + lo:2 * D + lo + head_dim]

        s = jnp.einsum('bqd,bkd->bqk', q, k,
                       preferred_element_type=jnp.float32)      # (Bt, N, N)
        # log_softmax(...).exp() == max-subtracted softmax
        m = jnp.max(s, axis=-1, keepdims=True)
        e = jnp.exp(s - m)
        p = e * pl.reciprocal(jnp.sum(e, axis=-1, keepdims=True), approx=True)

        pv = jnp.einsum('bqk,bkd->bqd', p.astype(jnp.bfloat16), v,
                        preferred_element_type=jnp.float32)     # (Bt, N, hd)
        attn_ref[:, lo:lo + head_dim] = (
            pv.reshape(rows, head_dim).astype(attn_ref.dtype))

    # ---- Output projection (proj_drop is Identity) ----
    out = jnp.dot(attn_ref[...], wproj_ref[...],
                  preferred_element_type=jnp.float32) + bproj_ref[...]
    o_ref[...] = out.reshape(Bt, N, D).astype(o_ref.dtype)


# ---------------------------------------------------------------------------
# Wrapper
# ---------------------------------------------------------------------------
def _choose_block_b(B, N, max_rows=512):
    """Largest divisor of B with Bt*N <= max_rows; keep >= 2 grid steps when
    B >= 2 so both TensorCores (v7x) are fed."""
    bt = 1
    for cand in range(1, B + 1):
        if B % cand == 0 and cand * N <= max_rows:
            bt = cand
    if B >= 2 and B // bt < 2:
        for cand in range(bt - 1, 0, -1):
            if B % cand == 0 and B // cand >= 2:
                bt = cand
                break
    return bt


def attention(x, params, *, num_heads, block_b=None):
    # TODO(synk): only the default 'Global' mixer path is implemented; the
    # 'Local' (additive -inf mask) and 'Conv' mixer variants are not.
    B, N, D = x.shape
    assert D % num_heads == 0
    head_dim = D // num_heads
    scale = head_dim ** -0.5

    Bt = block_b or _choose_block_b(B, N)
    assert B % Bt == 0

    # PyTorch Linear stores weight as (out, in); pre-transpose so the kernel does
    # x @ W.  Fold the attention scale into the Q columns, then cast weights to
    # bf16 (MXU-native); biases stay f32 and are added post-accumulation.
    wqkv_t = params["wqkv"].T.astype(jnp.float32)                 # (D, 3D)
    wqkv_t = jnp.concatenate([wqkv_t[:, :D] * scale, wqkv_t[:, D:]], axis=1)
    bqkv = params["bqkv"].astype(jnp.float32)
    bqkv = jnp.concatenate([bqkv[:D] * scale, bqkv[D:]])
    wqkv_bf = wqkv_t.astype(jnp.bfloat16)
    wproj_bf = params["wproj"].T.astype(jnp.bfloat16)             # (D, D)

    row = lambda v: v.reshape(1, -1).astype(jnp.float32)

    def full(shape):
        return pl.BlockSpec(shape, lambda b: (0,) * len(shape))

    kernel = partial(attention_kernel, num_heads=num_heads, head_dim=head_dim)

    # Note: default scoped VMEM (16/32 MiB) is ample here; for very large D/Bt
    # set pltpu.CompilerParams(vmem_limit_bytes=...) explicitly.
    return pl.pallas_call(
        kernel,
        out_shape=jax.ShapeDtypeStruct((B, N, D), x.dtype),
        grid=(B // Bt,),
        in_specs=[
            pl.BlockSpec((Bt, N, D), lambda b: (b, 0, 0)),        # x
            full((D, 3 * D)),                                     # qkv weight (bf16)
            full((1, 3 * D)),                                     # qkv bias   (f32)
            full((D, D)),                                         # proj weight (bf16)
            full((1, D)),                                         # proj bias   (f32)
        ],
        out_specs=pl.BlockSpec((Bt, N, D), lambda b: (b, 0, 0)),
        scratch_shapes=[pltpu.VMEM((Bt * N, D), jnp.bfloat16)],   # per-head PV slab
        compiler_params=pltpu.CompilerParams(
            dimension_semantics=("parallel",)),
    )(x, wqkv_bf, row(bqkv), wproj_bf, row(params["bproj"]))


# ---------------------------------------------------------------------------
# Pure-JAX reference (mirrors the PyTorch forward) for correctness check
# ---------------------------------------------------------------------------
def ref_attention(x, params, num_heads):
    B, N, D = x.shape
    hd = D // num_heads
    scale = hd ** -0.5
    qkv = x @ params["wqkv"].T + params["bqkv"]
    qkv = qkv.reshape(B, N, 3, num_heads, hd).transpose(2, 0, 3, 1, 4)
    q, k, v = qkv[0] * scale, qkv[1], qkv[2]
    attn = q @ jnp.swapaxes(k, -1, -2)
    attn = jnp.exp(jax.nn.log_softmax(attn, axis=-1))
    out = (attn @ v).transpose(0, 2, 1, 3).reshape(B, N, D)
    return out @ params["wproj"].T + params["bproj"]


if __name__ == "__main__":
    key = jax.random.PRNGKey(0)
    B, N, D, H = 2, 8, 32, 2          # batch=2, seq=8, dim=32, heads=2 -> head_dim=16

    ks = jax.random.split(key, 5)
    init = lambda k, shape: 0.02 * jax.random.normal(k, shape, jnp.float32)
    params = dict(
        wqkv=init(ks[0], (3 * D, D)), bqkv=init(ks[1], (3 * D,)),
        wproj=init(ks[2], (D, D)),    bproj=init(ks[3], (D,)),
    )
    x = jax.random.normal(ks[4], (B, N, D), jnp.float32)

    out = attention(x, params, num_heads=H)
    out = jax.block_until_ready(out)

    ref = ref_attention(x, params, H)
    assert out.shape == (B, N, D)
    np.testing.assert_allclose(np.asarray(out), np.asarray(ref), rtol=2e-2, atol=2e-3)

    print("KERNEL_OK")
</pallas_src>

<mosaic_0001>
module attributes {stable_mosaic.version = 11 : i64} {
  func.func @attention_kernel(%arg0: i32, %arg1: memref<1x8x32xf32, #tpu.memory_space<vmem>>, %arg2: memref<32x96xbf16, #tpu.memory_space<vmem>>, %arg3: memref<1x96xf32, #tpu.memory_space<vmem>>, %arg4: memref<32x32xbf16, #tpu.memory_space<vmem>>, %arg5: memref<1x32xf32, #tpu.memory_space<vmem>>, %arg6: memref<1x8x32xf32, #tpu.memory_space<vmem>>, %arg7: memref<8x32xbf16, #tpu.memory_space<vmem>>) attributes {dimension_semantics = [#tpu.dimension_semantics<parallel>], iteration_bounds = array<i64: 2>, scalar_prefetch = 0 : i64, scratch_operands = 1 : i64, tpu.core_type = #tpu.core_type<tc>, window_params = [{transform_indices = @transform_0, window_bounds = array<i64: 1, 8, 32>}, {pipeline_mode = #tpu.pipeline_mode<synchronous>, transform_indices = @transform_1, window_bounds = array<i64: 32, 96>}, {pipeline_mode = #tpu.pipeline_mode<synchronous>, transform_indices = @transform_2, window_bounds = array<i64: 1, 96>}, {pipeline_mode = #tpu.pipeline_mode<synchronous>, transform_indices = @transform_3, window_bounds = array<i64: 32, 32>}, {pipeline_mode = #tpu.pipeline_mode<synchronous>, transform_indices = @transform_4, window_bounds = array<i64: 1, 32>}, {transform_indices = @transform_5, window_bounds = array<i64: 1, 8, 32>}]} {
    %c0 = arith.constant 0 : index
    %c0_0 = arith.constant 0 : index
    %c0_1 = arith.constant 0 : index
    %0 = vector.load %arg1[%c0, %c0_0, %c0_1] : memref<1x8x32xf32, #tpu.memory_space<vmem>>, vector<1x8x32xf32>
    %1 = vector.shape_cast %0 : vector<1x8x32xf32> to vector<8x32xf32>
    %2 = arith.truncf %1 : vector<8x32xf32> to vector<8x32xbf16>
    %c0_2 = arith.constant 0 : index
    %c0_3 = arith.constant 0 : index
    %3 = vector.load %arg2[%c0_2, %c0_3] : memref<32x96xbf16, #tpu.memory_space<vmem>>, vector<32x96xbf16>
    %cst = arith.constant dense<0.000000e+00> : vector<8x96xf32>
    %4 = tpu.matmul %2, %3, %cst {dimension_numbers = #tpu.dot_dimension_numbers<[1], [0], [0], [1], [0, 0, 1, 1], [], []>} : vector<8x32xbf16>, vector<32x96xbf16>, vector<8x96xf32> -> vector<8x96xf32>
    %c0_4 = arith.constant 0 : index
    %c0_5 = arith.constant 0 : index
    %5 = vector.load %arg3[%c0_4, %c0_5] : memref<1x96xf32, #tpu.memory_space<vmem>>, vector<1x96xf32>
    %6 = vector.broadcast %5 : vector<1x96xf32> to vector<8x96xf32>
    %7 = arith.addf %4, %6 : vector<8x96xf32>
    %8 = arith.truncf %7 : vector<8x96xf32> to vector<8x96xbf16>
    %9 = vector.shape_cast %8 : vector<8x96xbf16> to vector<1x8x96xbf16>
    %10 = vector.extract_strided_slice %9 {offsets = [0, 0, 0], sizes = [1, 8, 16], strides = [1, 1, 1]} : vector<1x8x96xbf16> to vector<1x8x16xbf16>
    %11 = vector.extract_strided_slice %9 {offsets = [0, 0, 32], sizes = [1, 8, 16], strides = [1, 1, 1]} : vector<1x8x96xbf16> to vector<1x8x16xbf16>
    %12 = vector.extract_strided_slice %9 {offsets = [0, 0, 64], sizes = [1, 8, 16], strides = [1, 1, 1]} : vector<1x8x96xbf16> to vector<1x8x16xbf16>
    "tpu.trace_start"() <{level = 10 : i32, message = "bqd,bkd->bqk"}> : () -> ()
    %cst_6 = arith.constant dense<0.000000e+00> : vector<1x8x8xf32>
    %13 = tpu.matmul %10, %11, %cst_6 {dimension_numbers = #tpu.dot_dimension_numbers<[2], [2], [1], [1], [0, 0, 0, 1, 1, 1], [0], [0]>} : vector<1x8x16xbf16>, vector<1x8x16xbf16>, vector<1x8x8xf32> -> vector<1x8x8xf32>
    "tpu.trace_stop"() : () -> ()
    %cst_7 = arith.constant dense<0xFF800000> : vector<1x8xf32>
    %14 = vector.multi_reduction <maximumf>, %13, %cst_7 [2] : vector<1x8x8xf32> to vector<1x8xf32>
    %15 = vector.shape_cast %14 : vector<1x8xf32> to vector<1x8x1xf32>
    %16 = vector.broadcast %15 : vector<1x8x1xf32> to vector<1x8x8xf32>
    %17 = arith.subf %13, %16 : vector<1x8x8xf32>
    %18 = math.exp %17 : vector<1x8x8xf32>
    %cst_8 = arith.constant dense<0.000000e+00> : vector<1x8xf32>
    %19 = vector.multi_reduction <add>, %18, %cst_8 [2] : vector<1x8x8xf32> to vector<1x8xf32>
    %20 = vector.shape_cast %19 : vector<1x8xf32> to vector<1x8x1xf32>
    %21 = tpu.reciprocal %20 {approx = true} : vector<1x8x1xf32> -> vector<1x8x1xf32>
    %22 = vector.broadcast %21 : vector<1x8x1xf32> to vector<1x8x8xf32>
    %23 = arith.mulf %18, %22 : vector<1x8x8xf32>
    %24 = arith.truncf %23 : vector<1x8x8xf32> to vector<1x8x8xbf16>
    "tpu.trace_start"() <{level = 10 : i32, message = "bqk,bkd->bqd"}> : () -> ()
    %cst_9 = arith.constant dense<0.000000e+00> : vector<1x8x16xf32>
    %25 = tpu.matmul %24, %12, %cst_9 {dimension_numbers = #tpu.dot_dimension_numbers<[2], [1], [1], [2], [0, 0, 0, 1, 1, 2], [0], [0]>} : vector<1x8x8xbf16>, vector<1x8x16xbf16>, vector<1x8x16xf32> -> vector<1x8x16xf32>
    "tpu.trace_stop"() : () -> ()
    %26 = vector.shape_cast %25 : vector<1x8x16xf32> to vector<8x16xf32>
    %27 = arith.truncf %26 : vector<8x16xf32> to vector<8x16xbf16>
    %c0_10 = arith.constant 0 : index
    %c0_11 = arith.constant 0 : index
    %28 = vector.load %arg7[%c0_10, %c0_11] : memref<8x32xbf16, #tpu.memory_space<vmem>>, vector<8x16xbf16>
    tpu.vector_store %arg7[%c0_10, %c0_11], %27 {strides = array<i32>} : memref<8x32xbf16, #tpu.memory_space<vmem>>, vector<8x16xbf16>,
    %29 = vector.extract_strided_slice %9 {offsets = [0, 0, 16], sizes = [1, 8, 16], strides = [1, 1, 1]} : vector<1x8x96xbf16> to vector<1x8x16xbf16>
    %30 = vector.extract_strided_slice %9 {offsets = [0, 0, 48], sizes = [1, 8, 16], strides = [1, 1, 1]} : vector<1x8x96xbf16> to vector<1x8x16xbf16>
    %31 = vector.extract_strided_slice %9 {offsets = [0, 0, 80], sizes = [1, 8, 16], strides = [1, 1, 1]} : vector<1x8x96xbf16> to vector<1x8x16xbf16>
    "tpu.trace_start"() <{level = 10 : i32, message = "bqd,bkd->bqk"}> : () -> ()
    %cst_12 = arith.constant dense<0.000000e+00> : vector<1x8x8xf32>
    %32 = tpu.matmul %29, %30, %cst_12 {dimension_numbers = #tpu.dot_dimension_numbers<[2], [2], [1], [1], [0, 0, 0, 1, 1, 1], [0], [0]>} : vector<1x8x16xbf16>, vector<1x8x16xbf16>, vector<1x8x8xf32> -> vector<1x8x8xf32>
    "tpu.trace_stop"() : () -> ()
    %cst_13 = arith.constant dense<0xFF800000> : vector<1x8xf32>
    %33 = vector.multi_reduction <maximumf>, %32, %cst_13 [2] : vector<1x8x8xf32> to vector<1x8xf32>
    %34 = vector.shape_cast %33 : vector<1x8xf32> to vector<1x8x1xf32>
    %35 = vector.broadcast %34 : vector<1x8x1xf32> to vector<1x8x8xf32>
    %36 = arith.subf %32, %35 : vector<1x8x8xf32>
    %37 = math.exp %36 : vector<1x8x8xf32>
    %cst_14 = arith.constant dense<0.000000e+00> : vector<1x8xf32>
    %38 = vector.multi_reduction <add>, %37, %cst_14 [2] : vector<1x8x8xf32> to vector<1x8xf32>
    %39 = vector.shape_cast %38 : vector<1x8xf32> to vector<1x8x1xf32>
    %40 = tpu.reciprocal %39 {approx = true} : vector<1x8x1xf32> -> vector<1x8x1xf32>
    %41 = vector.broadcast %40 : vector<1x8x1xf32> to vector<1x8x8xf32>
    %42 = arith.mulf %37, %41 : vector<1x8x8xf32>
    %43 = arith.truncf %42 : vector<1x8x8xf32> to vector<1x8x8xbf16>
    "tpu.trace_start"() <{level = 10 : i32, message = "bqk,bkd->bqd"}> : () -> ()
    %cst_15 = arith.constant dense<0.000000e+00> : vector<1x8x16xf32>
    %44 = tpu.matmul %43, %31, %cst_15 {dimension_numbers = #tpu.dot_dimension_numbers<[2], [1], [1], [2], [0, 0, 0, 1, 1, 2], [0], [0]>} : vector<1x8x8xbf16>, vector<1x8x16xbf16>, vector<1x8x16xf32> -> vector<1x8x16xf32>
    "tpu.trace_stop"() : () -> ()
    %45 = vector.shape_cast %44 : vector<1x8x16xf32> to vector<8x16xf32>
    %46 = arith.truncf %45 : vector<8x16xf32> to vector<8x16xbf16>
    %c0_16 = arith.constant 0 : index
    %c16 = arith.constant 16 : index
    %47 = vector.load %arg7[%c0_16, %c16] : memref<8x32xbf16, #tpu.memory_space<vmem>>, vector<8x16xbf16>
    tpu.vector_store %arg7[%c0_16, %c16], %46 {strides = array<i32>} : memref<8x32xbf16, #tpu.memory_space<vmem>>, vector<8x16xbf16>,
    %c0_17 = arith.constant 0 : index
    %c0_18 = arith.constant 0 : index
    %48 = vector.load %arg7[%c0_17, %c0_18] : memref<8x32xbf16, #tpu.memory_space<vmem>>, vector<8x32xbf16>
    %c0_19 = arith.constant 0 : index
    %c0_20 = arith.constant 0 : index
    %49 = vector.load %arg4[%c0_19, %c0_20] : memref<32x32xbf16, #tpu.memory_space<vmem>>, vector<32x32xbf16>
    %cst_21 = arith.constant dense<0.000000e+00> : vector<8x32xf32>
    %50 = tpu.matmul %48, %49, %cst_21 {dimension_numbers = #tpu.dot_dimension_numbers<[1], [0], [0], [1], [0, 0, 1, 1], [], []>} : vector<8x32xbf16>, vector<32x32xbf16>, vector<8x32xf32> -> vector<8x32xf32>
    %c0_22 = arith.constant 0 : index
    %c0_23 = arith.constant 0 : index
    %51 = vector.load %arg5[%c0_22, %c0_23] : memref<1x32xf32, #tpu.memory_space<vmem>>, vector<1x32xf32>
    %52 = vector.broadcast %51 : vector<1x32xf32> to vector<8x32xf32>
    %53 = arith.addf %50, %52 : vector<8x32xf32>
    %54 = vector.shape_cast %53 : vector<8x32xf32> to vector<1x8x32xf32>
    %c0_24 = arith.constant 0 : index
    %c0_25 = arith.constant 0 : index
    %c0_26 = arith.constant 0 : index
    %55 = vector.load %arg6[%c0_24, %c0_25, %c0_26] : memref<1x8x32xf32, #tpu.memory_space<vmem>>, vector<1x8x32xf32>
    tpu.vector_store %arg6[%c0_24, %c0_25, %c0_26], %54 {strides = array<i32>} : memref<1x8x32xf32, #tpu.memory_space<vmem>>, vector<1x8x32xf32>,
    return
  }
  func.func @transform_0(%arg0: i32) -> (i32, i32, i32) {
    %c0_i32 = arith.constant 0 : i32
    %c0_i32_0 = arith.constant 0 : i32
    %c0_i32_1 = arith.constant 0 : i32
    return %arg0, %c0_i32, %c0_i32_0 : i32, i32, i32
  }
  func.func @transform_1(%arg0: i32) -> (i32, i32) {
    %c0_i32 = arith.constant 0 : i32
    %c0_i32_0 = arith.constant 0 : i32
    %c0_i32_1 = arith.constant 0 : i32
    return %c0_i32, %c0_i32_0 : i32, i32
  }
  func.func @transform_2(%arg0: i32) -> (i32, i32) {
    %c0_i32 = arith.constant 0 : i32
    %c0_i32_0 = arith.constant 0 : i32
    %c0_i32_1 = arith.constant 0 : i32
    return %c0_i32, %c0_i32_0 : i32, i32
  }
  func.func @transform_3(%arg0: i32) -> (i32, i32) {
    %c0_i32 = arith.constant 0 : i32
    %c0_i32_0 = arith.constant 0 : i32
    %c0_i32_1 = arith.constant 0 : i32
    return %c0_i32, %c0_i32_0 : i32, i32
  }
  func.func @transform_4(%arg0: i32) -> (i32, i32) {
    %c0_i32 = arith.constant 0 : i32
    %c0_i32_0 = arith.constant 0 : i32
    %c0_i32_1 = arith.constant 0 : i32
    return %c0_i32, %c0_i32_0 : i32, i32
  }
  func.func @transform_5(%arg0: i32) -> (i32, i32, i32) {
    %c0_i32 = arith.constant 0 : i32
    %c0_i32_0 = arith.constant 0 : i32
    %c0_i32_1 = arith.constant 0 : i32
    return %arg0, %c0_i32, %c0_i32_0 : i32, i32, i32
  }
}

</mosaic_0001>

<llo_original>
// kernel: tpu_custom_call.1
$region0: #{tpu_custom_call.1}
  #allocation0 [shape = 'u32[]', space=smem, size = 0x4, offset = 0x4, fixed_abs, tag = 'smem constant byte address 0x4 - core index']
  #allocation1 [shape = 'u32[72,128]{1,0:T(1,128)}', space=vmem, size = 0x9000, scoped, tag = 'internal scratch']
  #allocation2 [shape = 'bf16[8,32]{1,0:T(8,128)(2,1)}', space=vmem, size = 0x800, scoped, tag = 'scratch operand']
  %s0 = inlined_call_operand.hbm [shape: f32[2,8,32], index: 0, kind: input, shape index: {}]
  %s1 = inlined_call_operand.hbm [shape: bf16[32,96], index: 1, kind: input, shape index: {}]
  %s2 = inlined_call_operand.vmem [shape: f32[1,96], index: 2, kind: input, shape index: {}]
  %s3 = inlined_call_operand.hbm [shape: bf16[32,32], index: 3, kind: input, shape index: {}]
  %s4 = inlined_call_operand.vmem [shape: f32[1,32], index: 4, kind: input, shape index: {}]
  %s5 = inlined_call_operand.hbm [shape: f32[2,8,32], index: 5, kind: output, shape index: {}]
  %s6 = sld [smem:[#allocation0]]
  $region65: #{tpu_custom_call.1} parent=0
    _
  %s8 = ssub.s32 1, %s6
  %s9 = scalar_select 0, %s8, %s6
  $region1: #{tpu_custom_call.1} parent=0
    #allocation3 [shape = 'u8[8192]{0}', space=vmem, size = 0x2000, scoped, tag = 'input window, operand 0']
    #allocation4 [shape = 's32[2]{0}', space=sflag, size = 0x8, scoped, tag = 'scoped memory for tpu_custom_call.1']
    #allocation5 [shape = 's32[2]{0}', space=sflag, size = 0x8, scoped, tag = 'scoped memory for tpu_custom_call.1']
    #allocation6 [shape = 'u8[8192]{0}', space=vmem, size = 0x2000, scoped, tag = 'input window, operand 1, single buffered']
    #allocation7 [shape = 's32[1]{0}', space=sflag, size = 0x4, scoped, tag = 'scoped memory for tpu_custom_call.1']
    #allocation8 [shape = 'u8[8192]{0}', space=vmem, size = 0x2000, scoped, tag = 'input window, operand 3, single buffered']
    #allocation9 [shape = 'u8[8192]{0}', space=vmem, size = 0x2000, scoped, tag = 'output window, operand 0']
    %10 = vsyncpa [#allocation4], 0
    %s11 = scalar_lea.sflag [#allocation4], 1
    %12 = vsyncpa %s11, 0
    %13 = vsyncpa [#allocation7], 0
    %14 = vsyncpa [#allocation5], 0
    %s15 = scalar_lea.sflag [#allocation5], 1
    %16 = vsyncpa %s15, 0
    loop: start=0, step=1, limit=4
    $region2: #{tpu_custom_call.1} parent=1 // loop_pre_header
      _
    $region3: #{tpu_custom_call.1} parent=1 // loop_header
      %s18 = sphi 0, %s22
      %p19 = scmp.ge.s32.totalorder %s18, 4
      %s28 = sphi 0, %s30
      %s31 = sphi 0, %s28
      %s32 = sphi 0, %s31
      %s48 = sphi 0, %s32
      %s52 = sphi 0, %s52
      %s54 = sphi 0, %s52
      %s55 = sphi 0, %s54
      %s69 = sphi 0, %s55
      %s73 = sphi 0, %s73
      %s75 = sphi 0, %s73
      %s76 = sphi 0, %s75
      %s90 = sphi 0, %s76
      %s94 = sphi 0, %s94
      %s96 = sphi 0, %s94
      %s97 = sphi 0, %s96
      %s111 = sphi 0, %s97
      %s115 = sphi 0, %s115
      %s117 = sphi 0, %s115
      %s118 = sphi 0, %s117
      %s132 = sphi 0, %s118
      %s138 = sphi 0, %s140
      %s141 = sphi 0, %s138
      %s142 = sphi 0, %s141
      %s158 = sphi 0, %s142
    $region4: #{tpu_custom_call.1} parent=1 // loop_header_branch
      %21 = sbr.rel (%p19) target = $region8
    $region5: #{tpu_custom_call.1} parent=1 // loop_body
      %s23 = ssub.s32 %s18, 1
      %s24 = ssub.s32 %s18, 2
      %s25 = sadd.s32 %s18, 1
      %s26 = ssub.s32 %s18, %s25
      %p27 = scmp.eq.s32.totalorder %s26, 0
      %s29 = sadd.s32 %s28, 1
      %s30 = scalar_select %p27, %s28, %s29
      %p33 = pneg %p27
      %p34 = scmp.eq.s32.totalorder %s18, 1
      %p35 = por %p33, %p34
      %p36 = scmp.ne.s32.totalorder %s28, %s31
      %p37 = scmp.eq.s32.totalorder %s18, 0
      %p38 = por %p36, %p37
      %p39 = scmp.ne.s32.totalorder %s28, %s31
      %p40 = scmp.eq.s32.totalorder %s23, 1
      %p41 = por %p39, %p40
      %p42 = scmp.ne.s32.totalorder %s31, %s32
      %p43 = scmp.eq.s32.totalorder %s23, 0
      %p44 = por %p42, %p43
      %p45 = scmp.ne.s32.totalorder %s31, %s32
      %p46 = scmp.eq.s32.totalorder %s24, 1
      %p47 = por %p45, %p46
      %p49 = scmp.ne.s32.totalorder %s32, %s48
      %p50 = scmp.eq.s32.totalorder %s24, 0
      %p51 = por %p49, %p50
      %s53 = sadd.s32 %s52, 1
      %p56 = scmp.eq.s32.totalorder %s18, 1
      %p57 = scmp.ne.s32.totalorder %s52, %s54
      %p58 = scmp.eq.s32.totalorder %s18, 0
      %p59 = por %p57, %p58
      %p60 = scmp.ne.s32.totalorder %s52, %s54
      %p61 = scmp.eq.s32.totalorder %s23, 1
      %p62 = por %p60, %p61
      %p63 = scmp.ne.s32.totalorder %s54, %s55
      %p64 = scmp.eq.s32.totalorder %s23, 0
      %p65 = por %p63, %p64
      %p66 = scmp.ne.s32.totalorder %s54, %s55
      %p67 = scmp.eq.s32.totalorder %s24, 1
      %p68 = por %p66, %p67
      %p70 = scmp.ne.s32.totalorder %s55, %s69
      %p71 = scmp.eq.s32.totalorder %s24, 0
      %p72 = por %p70, %p71
      %s74 = sadd.s32 %s73, 1
      %p77 = scmp.eq.s32.totalorder %s18, 1
      %p78 = scmp.ne.s32.totalorder %s73, %s75
      %p79 = scmp.eq.s32.totalorder %s18, 0
      %p80 = por %p78, %p79
      %p81 = scmp.ne.s32.totalorder %s73, %s75
      %p82 = scmp.eq.s32.totalorder %s23, 1
      %p83 = por %p81, %p82
      %p84 = scmp.ne.s32.totalorder %s75, %s76
      %p85 = scmp.eq.s32.totalorder %s23, 0
      %p86 = por %p84, %p85
      %p87 = scmp.ne.s32.totalorder %s75, %s76
      %p88 = scmp.eq.s32.totalorder %s24, 1
      %p89 = por %p87, %p88
      %p91 = scmp.ne.s32.totalorder %s76, %s90
      %p92 = scmp.eq.s32.totalorder %s24, 0
      %p93 = por %p91, %p92
      %s95 = sadd.s32 %s94, 1
      %p98 = scmp.eq.s32.totalorder %s18, 1
      %p99 = scmp.ne.s32.totalorder %s94, %s96
      %p100 = scmp.eq.s32.totalorder %s18, 0
      %p101 = por %p99, %p100
      %p102 = scmp.ne.s32.totalorder %s94, %s96
      %p103 = scmp.eq.s32.totalorder %s23, 1
      %p104 = por %p102, %p103
      %p105 = scmp.ne.s32.totalorder %s96, %s97
      %p106 = scmp.eq.s32.totalorder %s23, 0
      %p107 = por %p105, %p106
      %p108 = scmp.ne.s32.totalorder %s96, %s97
      %p109 = scmp.eq.s32.totalorder %s24, 1
      %p110 = por %p108, %p109
      %p112 = scmp.ne.s32.totalorder %s97, %s111
      %p113 = scmp.eq.s32.totalorder %s24, 0
      %p114 = por %p112, %p113
      %s116 = sadd.s32 %s115, 1
      %p119 = scmp.eq.s32.totalorder %s18, 1
      %p120 = scmp.ne.s32.totalorder %s115, %s117
      %p121 = scmp.eq.s32.totalorder %s18, 0
      %p122 = por %p120, %p121
      %p123 = scmp.ne.s32.totalorder %s115, %s117
      %p124 = scmp.eq.s32.totalorder %s23, 1
      %p125 = por %p123, %p124
      %p126 = scmp.ne.s32.totalorder %s117, %s118
      %p127 = scmp.eq.s32.totalorder %s23, 0
      %p128 = por %p126, %p127
      %p129 = scmp.ne.s32.totalorder %s117, %s118
      %p130 = scmp.eq.s32.totalorder %s24, 1
      %p131 = por %p129, %p130
      %p133 = scmp.ne.s32.totalorder %s118, %s132
      %p134 = scmp.eq.s32.totalorder %s24, 0
      %p135 = por %p133, %p134
      %s136 = ssub.s32 %s18, %s25
      %p137 = scmp.eq.s32.totalorder %s136, 0
      %s139 = sadd.s32 %s138, 1
      %s140 = scalar_select %p137, %s138, %s139
      %p143 = pneg %p137
      %p144 = scmp.eq.s32.totalorder %s18, 1
      %p145 = por %p143, %p144
      %p146 = scmp.ne.s32.totalorder %s138, %s141
      %p147 = scmp.eq.s32.totalorder %s18, 0
      %p148 = por %p146, %p147
      %p149 = scmp.ne.s32.totalorder %s138, %s141
      %p150 = scmp.eq.s32.totalorder %s23, 1
      %p151 = por %p149, %p150
      %p152 = scmp.ne.s32.totalorder %s141, %s142
      %p153 = scmp.eq.s32.totalorder %s23, 0
      %p154 = por %p152, %p153
      %p155 = scmp.ne.s32.totalorder %s141, %s142
      %p156 = scmp.eq.s32.totalorder %s24, 1
      %p157 = por %p155, %p156
      %p159 = scmp.ne.s32.totalorder %s142, %s158
      %p160 = scmp.eq.s32.totalorder %s24, 0
      %p161 = por %p159, %p160
      %p162 = scmp.le.s32.totalorder 1, %s18
      %p163 = scmp.lt.s32.totalorder %s18, 3
      %p164 = pnand %p162, %p163
      %p165 = pneg %p164
      // Predicated region
      $region9: #{tpu_custom_call.1} parent=5 // pred_check
        _
      $region10: #{tpu_custom_call.1} parent=5 // pred_check_branch
        %167 = sbr.rel (%p164) target = $region12
      $region11: #{tpu_custom_call.1} parent=5 // pred_region
        %s168 = ssub.s32 %s18, 1
        // Predicated region
        $region13: #{tpu_custom_call.1} parent=11 // pred_check
          %p169 = pneg %p65
        $region14: #{tpu_custom_call.1} parent=11 // pred_check_branch
          %171 = sbr.rel (%p169) target = $region16
        $region15: #{tpu_custom_call.1} parent=11 // pred_region
          %173 = vsyncadd [#allocation7], 0
          %s174 = sshll.u32 %s1, 4
          %s175 = int_to_ptr.hbm [resolvable:$true] %s174
          %s176 = sshll.u32 [#allocation6], 4
          %s177 = int_to_ptr.vmem [resolvable:$true] %s176
          %182 = dma.hbm_to_vmem [thread:$0]  %s175, 256, %s177, [#allocation7], 64, 64, 4
        $region16: #{tpu_custom_call.1} parent=11 // pred_fallthru
          _
        // Predicated region
        $region17: #{tpu_custom_call.1} parent=11 // pred_check
          %p183 = pneg %p86
        $region18: #{tpu_custom_call.1} parent=11 // pred_check_branch
          %185 = sbr.rel (%p183) target = $region20
        $region19: #{tpu_custom_call.1} parent=11 // pred_region
          _
        $region20: #{tpu_custom_call.1} parent=11 // pred_fallthru
          _
        // Predicated region
        $region21: #{tpu_custom_call.1} parent=11 // pred_check
          %p186 = pneg %p107
        $region22: #{tpu_custom_call.1} parent=11 // pred_check_branch
          %188 = sbr.rel (%p186) target = $region24
        $region23: #{tpu_custom_call.1} parent=11 // pred_region
          %190 = vsyncadd [#allocation7], 0
          %s191 = sshll.u32 %s3, 4
          %s192 = int_to_ptr.hbm [resolvable:$true] %s191
          %s193 = sshll.u32 [#allocation8], 4
          %s194 = int_to_ptr.vmem [resolvable:$true] %s193
          %199 = dma.hbm_to_vmem [thread:$0]  %s192, 256, %s194, [#allocation7], 64, 64, 4
        $region24: #{tpu_custom_call.1} parent=11 // pred_fallthru
          _
        // Predicated region
        $region25: #{tpu_custom_call.1} parent=11 // pred_check
          %p200 = pneg %p128
        $region26: #{tpu_custom_call.1} parent=11 // pred_check_branch
          %202 = sbr.rel (%p200) target = $region28
        $region27: #{tpu_custom_call.1} parent=11 // pred_region
          _
        $region28: #{tpu_custom_call.1} parent=11 // pred_fallthru
          _
      $region12: #{tpu_custom_call.1} parent=5 // pred_fallthru
        _
      %p203 = scmp.lt.s32.totalorder %s18, 2
      // Predicated region
      $region29: #{tpu_custom_call.1} parent=5 // pred_check
        %p204 = pneg %p203
      $region30: #{tpu_custom_call.1} parent=5 // pred_check_branch
        %206 = sbr.rel (%p204) target = $region32
      $region31: #{tpu_custom_call.1} parent=5 // pred_region
        // Predicated region
        $region33: #{tpu_custom_call.1} parent=31 // pred_check
          %p207 = pneg %p38
        $region34: #{tpu_custom_call.1} parent=31 // pred_check_branch
          %209 = sbr.rel (%p207) target = $region36
        $region35: #{tpu_custom_call.1} parent=31 // pred_region
          %s210 = sand.u32 %s28, 1
          %s211 = scalar_lea.sflag [#allocation4], %s210
          %s212 = sand.u32 %s28, 1
          %s213 = smul.addr %s212, 8
          %s214 = scalar_lea.vmem [#allocation3], %s213
          %216 = vsyncadd %s211, 0
          %s217 = smul.addr %s18, 8
          %s218 = scalar_lea.hbm %s0, %s217
          %s220 = sshll.u32 %s218, 4
          %s221 = int_to_ptr.hbm [resolvable:$true] %s220
          %s222 = sshll.u32 %s214, 4
          %s223 = int_to_ptr.vmem [resolvable:$true] %s222
          %225 = dma.hbm_to_vmem [thread:$0]  %s221, 128, %s223, %s211
        $region36: #{tpu_custom_call.1} parent=31 // pred_fallthru
          _
      $region32: #{tpu_custom_call.1} parent=5 // pred_fallthru
        _
      %p226 = scmp.le.s32.totalorder 1, %s18
      %p227 = scmp.lt.s32.totalorder %s18, 3
      %p228 = pnand %p226, %p227
      %p229 = pneg %p228
      // Predicated region
      $region37: #{tpu_custom_call.1} parent=5 // pred_check
        _
      $region38: #{tpu_custom_call.1} parent=5 // pred_check_branch
        %231 = sbr.rel (%p228) target = $region40
      $region39: #{tpu_custom_call.1} parent=5 // pred_region
        %s232 = ssub.s32 %s18, 1
        %s233 = sand.u32 %s31, 1
        %s234 = scalar_lea.sflag [#allocation4], %s233
        %s235 = sand.u32 %s31, 1
        %s236 = smul.addr %s235, 8
        %s237 = scalar_lea.vmem [#allocation3], %s236
        // Predicated region
        $region41: #{tpu_custom_call.1} parent=39 // pred_check
          %p238 = pneg %p44
        $region42: #{tpu_custom_call.1} parent=39 // pred_check_branch
          %240 = sbr.rel (%p238) target = $region44
        $region43: #{tpu_custom_call.1} parent=39 // pred_region
          %242 = dma.done %s234, 128
        $region44: #{tpu_custom_call.1} parent=39 // pred_fallthru
          _
        // Predicated region
        $region45: #{tpu_custom_call.1} parent=39 // pred_check
          %p243 = pneg %p65
        $region46: #{tpu_custom_call.1} parent=39 // pred_check_branch
          %245 = sbr.rel (%p243) target = $region48
        $region47: #{tpu_custom_call.1} parent=39 // pred_region
          %247 = dma.done [#allocation7], 256
        $region48: #{tpu_custom_call.1} parent=39 // pred_fallthru
          _
        // Predicated region
        $region49: #{tpu_custom_call.1} parent=39 // pred_check
          %p248 = pneg %p107
        $region50: #{tpu_custom_call.1} parent=39 // pred_check_branch
          %250 = sbr.rel (%p248) target = $region52
        $region51: #{tpu_custom_call.1} parent=39 // pred_region
          %252 = dma.done [#allocation7], 256
        $region52: #{tpu_custom_call.1} parent=39 // pred_fallthru
          _
        %s253 = sand.u32 %s31, 1
        %s254 = scalar_lea.sflag [#allocation4], %s253
        %s255 = sand.u32 %s31, 1
        %s256 = smul.addr %s255, 8
        %s257 = scalar_lea.vmem [#allocation3], %s256
        %p258 = pneg %p44
        %p259 = pneg %p41
        %p260 = pneg %p65
        %p261 = pneg %p62
        %p262 = pneg %p86
        %p263 = pneg %p83
        %p264 = pneg %p107
        %p265 = pneg %p104
        %p266 = pneg %p128
        %p267 = pneg %p125
        %p268 = pneg %p154
        %p269 = pneg %p151
        %s270 = sand.u32 %s141, 1
        %s271 = scalar_lea.sflag [#allocation5], %s270
        %s272 = sand.u32 %s141, 1
        %s273 = smul.addr %s272, 8
        %s274 = scalar_lea.vmem [#allocation9], %s273
        %v276 = vld [vmem:[%s237] sm:$0xff]
        %v277 = vpack.c.bf16 %v276, %v276
        %v278 = vld [vmem:[#allocation6] sm:$0xf]
        %v279 = vld [vmem:[#allocation6 + $0x4] sm:$0xf]
        %v280 = vld [vmem:[#allocation6 + $0x8] sm:$0xf]
        %v281 = vld [vmem:[#allocation6 + $0xc] sm:$0xf]
        %v282 = vld [vmem:[%s2] sm:$0x1]
        %v284 = vperm.slane %v282, 0
        %v290 = vunpack.c.l.b16 %v278
        %v291 = vunpack.c.l.b16 %v279
        %v292 = vunpack.c.l.b16 %v280
        %v293 = vunpack.c.l.b16 %v281
        %v294 = vpack.c.b16 %v291, %v290
        %v295 = vpack.c.b16 %v293, %v292
        %vm298 = vcmask 261120
        %v300 = vsel %vm298, %v277, 0
        %302 = vmatpush.bf16.msra.mxu0 0
        %303 = vmatpush.bf16.msra.mxu0 0
        %304 = vmatpush.bf16.msra.mxu0 0
        %305 = vmatpush.bf16.msra.mxu0 0
        %306 = vmatpush.bf16.msra.mxu0 0
        %307 = vmatpush.bf16.msra.mxu0 0
        %308 = vmatpush.bf16.msra.mxu0 %v295
        %309 = vmatpush.bf16.msra.mxu0 %v294
        %310 = vmatmul.bf16.gmra.mxu0 %v300
        %v311 = vpop.f32.mrf.mxu0
        %v312 = vadd.f32 %v284, %v311
        %v313 = vpop.f32.mrf.mxu0
        %314 = vdwg.mxu0
        %v315 = vpack.c.bf16 %v312, %v312
        %v317 = vunpack.c.l.b16 %v315
        %v318 = vpack.c.b16 %v317, %v317
        %319 = vrot.lane.b32.xlu0 %v318, 96
        %v320 = vpop.permute.xlu0 %319
        %vm321 = vcmask 130048
        %v323 = vsel %vm321, %v315, 0
        %v326 = vsel %vm321, %v320, 0
        %328 = vmatpush.bf16.xpose.msra.mxu0 0
        %329 = vmatpush.bf16.xpose.msra.mxu0 0
        %330 = vmatpush.bf16.xpose.msra.mxu0 0
        %331 = vmatpush.bf16.xpose.msra.mxu0 0
        %332 = vmatpush.bf16.xpose.msra.mxu0 0
        %333 = vmatpush.bf16.xpose.msra.mxu0 0
        %334 = vmatpush.bf16.xpose.msra.mxu0 0
        %335 = vmatpush.bf16.xpose.msra.mxu0 %v326
        %336 = vmatmul.bf16.gmra.mxu0 %v323
        %v337 = vpop.f32.mrf.mxu0
        %v338 = vadd.f32 0.0, %v337
        %v339 = vpop.f32.mrf.mxu0
        %340 = vdwg.mxu0
        %vm341 = vcmask 64512
        %v342 = vsel %vm341, %v338, -inf
        %343 = vmax.xlane.f32.xlu0 %v342
        %v344 = vpop.xlane.xlu0 %343
        %v345 = vsub.f32 %v338, %v344
        %v346 = vmul.f32 %v345, 1.442695
        %v347 = vpow.pop %v346
        %v348 = vsel %vm341, %v347, 0.0
        %349 = vadd.xlane.f32.xlu0 %v348
        %v350 = vpop.xlane.xlu0 %349
        %v351 = vrcp.pop %v350
        %v352 = vmul.f32 %v347, %v351
        %v353 = vpack.c.bf16 %v352, %v352
        %354 = vrot.lane.b32.xlu0 %v318, 64
        %v355 = vpop.permute.xlu0 %354
        %v357 = vsel %vm341, %v353, 0
        %vm359 = vcmask 1043456
        %v361 = vsel %vm359, %v355, 0
        %363 = vmatpush.bf16.msra.mxu0 0
        %364 = vmatpush.bf16.msra.mxu0 0
        %365 = vmatpush.bf16.msra.mxu0 0
        %366 = vmatpush.bf16.msra.mxu0 0
        %367 = vmatpush.bf16.msra.mxu0 0
        %368 = vmatpush.bf16.msra.mxu0 0
        %369 = vmatpush.bf16.msra.mxu0 0
        %370 = vmatpush.bf16.msra.mxu0 %v361
        %371 = vmatmul.bf16.gmra.mxu0 %v357
        %v372 = vpop.f32.mrf.mxu0
        %v373 = vadd.f32 0.0, %v372
        %v374 = vpop.f32.mrf.mxu0
        %375 = vdwg.mxu0
        %v376 = vpack.c.bf16 %v373, %v373
        %vm377 = vcmask 125952
        %378 = vst.msk [vmem:[#allocation2] sm:$0xf] %vm377, %v376
        %379 = vrot.lane.b32.xlu0 %v318, 112
        %v380 = vpop.permute.xlu0 %379
        %381 = vrot.lane.b32.xlu0 %v318, 80
        %v382 = vpop.permute.xlu0 %381
        %v384 = vsel %vm321, %v380, 0
        %v387 = vsel %vm321, %v382, 0
        %389 = vmatpush.bf16.xpose.msra.mxu0 0
        %390 = vmatpush.bf16.xpose.msra.mxu0 0
        %391 = vmatpush.bf16.xpose.msra.mxu0 0
        %392 = vmatpush.bf16.xpose.msra.mxu0 0
        %393 = vmatpush.bf16.xpose.msra.mxu0 0
        %394 = vmatpush.bf16.xpose.msra.mxu0 0
        %395 = vmatpush.bf16.xpose.msra.mxu0 0
        %396 = vmatpush.bf16.xpose.msra.mxu0 %v387
        %397 = vmatmul.bf16.gmra.mxu0 %v384
        %v398 = vpop.f32.mrf.mxu0
        %v399 = vadd.f32 0.0, %v398
        %v400 = vpop.f32.mrf.mxu0
        %401 = vdwg.mxu0
        %v402 = vsel %vm341, %v399, -inf
        %403 = vmax.xlane.f32.xlu0 %v402
        %v404 = vpop.xlane.xlu0 %403
        %v405 = vsub.f32 %v399, %v404
        %v406 = vmul.f32 %v405, 1.442695
        %v407 = vpow.pop %v406
        %v408 = vsel %vm341, %v407, 0.0
        %409 = vadd.xlane.f32.xlu0 %v408
        %v410 = vpop.xlane.xlu0 %409
        %v411 = vrcp.pop %v410
        %v412 = vmul.f32 %v407, %v411
        %v413 = vpack.c.bf16 %v412, %v412
        %414 = vrot.lane.b32.xlu0 %v318, 48
        %v415 = vpop.permute.xlu0 %414
        %v417 = vsel %vm341, %v413, 0
        %v420 = vsel %vm359, %v415, 0
        %422 = vmatpush.bf16.msra.mxu0 0
        %423 = vmatpush.bf16.msra.mxu0 0
        %424 = vmatpush.bf16.msra.mxu0 0
        %425 = vmatpush.bf16.msra.mxu0 0
        %426 = vmatpush.bf16.msra.mxu0 0
        %427 = vmatpush.bf16.msra.mxu0 0
        %428 = vmatpush.bf16.msra.mxu0 0
        %429 = vmatpush.bf16.msra.mxu0 %v420
        %430 = vmatmul.bf16.gmra.mxu0 %v417
        %v431 = vpop.f32.mrf.mxu0
        %v432 = vadd.f32 0.0, %v431
        %v433 = vpop.f32.mrf.mxu0
        %434 = vdwg.mxu0
        %v435 = vpack.c.bf16 %v432, %v432
        %437 = vrot.lane.b32.xlu0 %v435, 16
        %v438 = vpop.permute.xlu0 %437
        %vm440 = vcmask 257152
        %441 = vst.msk [vmem:[#allocation2] sm:$0xf] %vm440, %v438
        %v442 = vld [vmem:[#allocation2] sm:$0xf]
        %v443 = vld [vmem:[#allocation8] sm:$0xf]
        %v444 = vld [vmem:[#allocation8 + $0x4] sm:$0xf]
        %v445 = vld [vmem:[#allocation8 + $0x8] sm:$0xf]
        %v446 = vld [vmem:[#allocation8 + $0xc] sm:$0xf]
        %v447 = vld [vmem:[%s4] sm:$0x1]
        %v449 = vperm.slane %v447, 0
        %v455 = vunpack.c.l.b16 %v443
        %v456 = vunpack.c.l.b16 %v444
        %v457 = vunpack.c.l.b16 %v445
        %v458 = vunpack.c.l.b16 %v446
        %v459 = vpack.c.b16 %v456, %v455
        %v460 = vpack.c.b16 %v458, %v457
        %v464 = vsel %vm298, %v442, 0
        %466 = vmatpush.bf16.msra.mxu0 0
        %467 = vmatpush.bf16.msra.mxu0 0
        %468 = vmatpush.bf16.msra.mxu0 0
        %469 = vmatpush.bf16.msra.mxu0 0
        %470 = vmatpush.bf16.msra.mxu0 0
        %471 = vmatpush.bf16.msra.mxu0 0
        %472 = vmatpush.bf16.msra.mxu0 %v460
        %473 = vmatpush.bf16.msra.mxu0 %v459
        %474 = vmatmul.bf16.gmra.mxu0 %v464
        %v475 = vpop.f32.mrf.mxu0
        %v476 = vadd.f32 %v449, %v475
        %v477 = vpop.f32.mrf.mxu0
        %478 = vdwg.mxu0
        %479 = vst.msk [vmem:[%s274] sm:$0xff] %vm298, %v476
        %s480 = sand.u32 %s141, 1
        %s481 = scalar_lea.sflag [#allocation5], %s480
        %s482 = sand.u32 %s141, 1
        %s483 = smul.addr %s482, 8
        %s484 = scalar_lea.vmem [#allocation9], %s483
        // Predicated region
        $region53: #{tpu_custom_call.1} parent=39 // pred_check
          %p485 = pneg %p151
        $region54: #{tpu_custom_call.1} parent=39 // pred_check_branch
          %487 = sbr.rel (%p485) target = $region56
        $region55: #{tpu_custom_call.1} parent=39 // pred_region
          %489 = vsyncadd %s481, 0
          %s490 = smul.addr %s23, 8
          %s491 = scalar_lea.hbm %s5, %s490
          %s493 = sshll.u32 %s484, 4
          %s494 = int_to_ptr.vmem [resolvable:$true] %s493
          %s495 = sshll.u32 %s491, 4
          %s496 = int_to_ptr.hbm [resolvable:$true] %s495
          %498 = dma.vmem_to_hbm [thread:$0]  %s494, 128, %s496, %s481
        $region56: #{tpu_custom_call.1} parent=39 // pred_fallthru
          _
      $region40: #{tpu_custom_call.1} parent=5 // pred_fallthru
        _
      %p499 = scmp.le.s32.totalorder 2, %s18
      // Predicated region
      $region57: #{tpu_custom_call.1} parent=5 // pred_check
        %p500 = pneg %p499
      $region58: #{tpu_custom_call.1} parent=5 // pred_check_branch
        %502 = sbr.rel (%p500) target = $region60
      $region59: #{tpu_custom_call.1} parent=5 // pred_region
        %s503 = ssub.s32 %s18, 2
        // Predicated region
        $region61: #{tpu_custom_call.1} parent=59 // pred_check
          %p504 = pneg %p157
        $region62: #{tpu_custom_call.1} parent=59 // pred_check_branch
          %506 = sbr.rel (%p504) target = $region64
        $region63: #{tpu_custom_call.1} parent=59 // pred_region
          %s507 = sand.u32 %s142, 1
          %s508 = scalar_lea.sflag [#allocation5], %s507
          %s509 = sand.u32 %s142, 1
          %s510 = smul.addr %s509, 8
          %s511 = scalar_lea.vmem [#allocation9], %s510
          %513 = dma.done %s508, 128
        $region64: #{tpu_custom_call.1} parent=59 // pred_fallthru
          _
      $region60: #{tpu_custom_call.1} parent=5 // pred_fallthru
        _
    $region6: #{tpu_custom_call.1} parent=1 // loop_footer
      %s22 = sadd.s32 1, %s18
    $region7: #{tpu_custom_call.1} parent=1 // loop_footer_branch
      %17 = sbr.rel target = $region3
    $region8: #{tpu_custom_call.1} parent=1 // loop_exit
      _
    %514 = vsyncpa [#allocation4], 1
    %s515 = scalar_lea.sflag [#allocation4], 1
    %516 = vsyncpa %s515, 1
    %517 = vsyncpa [#allocation7], 1
    %518 = vsyncpa [#allocation5], 1
    %s519 = scalar_lea.sflag [#allocation5], 1
    %520 = vsyncpa %s519, 1

</llo_original>
